<compile_context>
chip_gen: v7x
topology: tpu7x:2x2x1
jax: 0.10.0
libtpu: 0.0.40
codegen_flags: <defaults>
</compile_context>

<pallas_src>
import functools

import jax
import jax.numpy as jnp
from jax import lax
from jax.experimental import pallas as pl
from jax.experimental.pallas import tpu as pltpu


def _self_attn_kernel(xq_ref, xf_ref, w_ref, b_ref, gamma_ref,
                      out_ref, attn_ref, q_sc, k_sc, v_sc, *, c8, tq):
    """One (batch, query-tile) grid cell."""
    qi = pl.program_id(1)

    # ---- per-batch QKV projection cache (qi axis is "arbitrary") ----------
    # Runs once per batch; the fused lane-wide bf16 matmul projects the whole
    # sequence and the results are cached in VMEM scratch for every query tile.
    @pl.when(qi == 0)
    def _():
        qkv = jnp.dot(xf_ref[0], w_ref[...],
                      preferred_element_type=jnp.float32) + b_ref[...]
        q_sc[...] = qkv[:, :c8].astype(jnp.bfloat16)            # (N, C8)
        k_sc[...] = qkv[:, c8:2 * c8].astype(jnp.bfloat16)      # (N, C8)
        v_sc[...] = qkv[:, 2 * c8:].astype(jnp.bfloat16)        # (N, C)

    # ---- per-tile attention ------------------------------------------------
    row0 = pl.multiple_of(qi * tq, tq)
    q = q_sc[pl.ds(row0, tq), :]                                  # (tq, C8) bf16

    # energy = q @ k^T, contracted in NT form (no transpose materialised).
    energy = lax.dot_general(
        q, k_sc[...],
        dimension_numbers=(((1,), (1,)), ((), ())),
        preferred_element_type=jnp.float32)                      # (tq, N) f32

    # Numerically stable softmax over the key axis (f32 math, EUP reciprocal).
    m = jnp.max(energy, axis=-1, keepdims=True)
    p = jnp.exp(energy - m)
    att = p * pl.reciprocal(jnp.sum(p, axis=-1, keepdims=True), approx=True)

    # out = gamma * (att @ v) + x
    o = jnp.dot(att.astype(jnp.bfloat16), v_sc[...],
                preferred_element_type=jnp.float32)               # (tq, C) f32
    gamma = gamma_ref[0]                                          # SMEM scalar
    out_ref[0] = (gamma * o + xq_ref[0]).astype(out_ref.dtype)
    attn_ref[0] = att.astype(attn_ref.dtype)


def _vmem_budget_bytes():
    """Generation-aware VMEM budget (75% of physical, conservative fallback)."""
    cap = 64 * 1024 * 1024            # v7x per-TC -- safe everywhere
    try:
        info = pltpu.get_tpu_info()
        for attr in ("vmem_capacity_bytes", "vmem_size_bytes", "vmem_bytes"):
            v = getattr(info, attr, None)
            if v:
                cap = int(v)
                break
    except Exception:
        pass
    return int(cap) * 3 // 4


def _pick_query_tile(n, c, c8, attn_bytes, budget):
    """Largest query tile whose estimated VMEM footprint fits the budget."""
    fixed = (2 * n * c * 2                       # xf bf16 (double-buffered)
             + 2 * c * (2 * c8 + c) * 2          # fused [Wq|Wk|Wv] bf16
             + 2 * n * c8 * 2 + n * c * 2        # q/k/v scratch (bf16)
             + (2 << 20))                        # padding / compiler slack
    for cand in (1024, 512, 256, 128, 64, 32, 16, 8):
        if cand > n or n % cand:
            continue
        per_tile = (2 * cand * c * 4             # xq residual tile buffers
                    + 2 * cand * c * 4           # out tile buffers
                    + 2 * cand * n * attn_bytes  # attn tile buffers
                    + 3 * cand * n * 4)          # live f32 softmax temporaries
        if fixed + per_tile <= budget:
            return cand
    return n                                      # single full tile fallback


def self_attn_forward(x, wq, bq, wk, bk, wv, bv, gamma, *,
                      tq=None, attn_dtype=jnp.bfloat16):
    """x: (B, N, C) float32.  Linear weights pre-transposed to (in, out)."""
    B, N, C = x.shape
    C8 = wq.shape[1]

    budget = _vmem_budget_bytes()
    attn_bytes = jnp.dtype(attn_dtype).itemsize
    if tq is None:
        tq = _pick_query_tile(N, C, C8, attn_bytes, budget)
    assert N % tq == 0 and (tq == N or tq % 8 == 0), (N, tq)
    nq = N // tq

    # Fused [Wq | Wk | Wv] -> one lane-wide bf16 projection matmul.
    w_qkv = jnp.concatenate([wq, wk, wv], axis=1).astype(jnp.bfloat16)  # (C, 2C8+C)
    b_qkv = jnp.concatenate([bq, bk, bv], axis=0).reshape(
        1, 2 * C8 + C).astype(jnp.float32)
    gamma_s = gamma.reshape(1).astype(jnp.float32)
    # Projection source in bf16 (halves the per-batch DMA); residual stays f32.
    x_bf16 = x.astype(jnp.bfloat16)

    kernel = functools.partial(_self_attn_kernel, c8=C8, tq=tq)
    const = lambda shape: pl.BlockSpec(shape, lambda b, qi: tuple(0 for _ in shape))

    out, attn = pl.pallas_call(
        kernel,
        out_shape=(
            jax.ShapeDtypeStruct((B, N, C), x.dtype),
            jax.ShapeDtypeStruct((B, N, N), attn_dtype),
        ),
        grid_spec=pltpu.PrefetchScalarGridSpec(
            num_scalar_prefetch=0,
            grid=(B, nq),
            in_specs=[
                pl.BlockSpec((1, tq, C), lambda b, qi: (b, qi, 0)),  # residual tile (f32)
                pl.BlockSpec((1, N, C), lambda b, qi: (b, 0, 0)),    # full seq (bf16), 1 DMA/batch
                const((C, 2 * C8 + C)),                              # [Wq|Wk|Wv]^T (bf16)
                const((1, 2 * C8 + C)),                              # [bq|bk|bv]
                pl.BlockSpec(memory_space=pltpu.MemorySpace.SMEM),   # gamma scalar
            ],
            out_specs=[
                pl.BlockSpec((1, tq, C), lambda b, qi: (b, qi, 0)),  # out
                pl.BlockSpec((1, tq, N), lambda b, qi: (b, qi, 0)),  # attention
            ],
            scratch_shapes=[
                pltpu.VMEM((N, C8), jnp.bfloat16),   # cached Q
                pltpu.VMEM((N, C8), jnp.bfloat16),   # cached K
                pltpu.VMEM((N, C), jnp.bfloat16),    # cached V
            ],
        ),
        compiler_params=pltpu.CompilerParams(
            # qi must be "arbitrary" so the per-batch QKV cache is reused;
            # the batch axis stays "parallel" for megacore (v7x 2-TC) sharding.
            dimension_semantics=("parallel", "arbitrary"),
            vmem_limit_bytes=budget,
        ),
    )(x, x_bf16, w_qkv, b_qkv, gamma_s)
    return out, attn


def _reference(x, wq, bq, wk, bk, wv, bv, gamma):
    q = x @ wq + bq
    k = x @ wk + bk
    v = x @ wv + bv
    energy = jnp.einsum("bnd,bmd->bnm", q, k)
    att = jax.nn.softmax(energy, axis=-1)
    out = gamma.reshape(()) * jnp.einsum("bnm,bmc->bnc", att, v) + x
    return out, att


if __name__ == "__main__":
    B, N, in_dim = 2, 16, 32          # N = W*H (e.g. 4x4), C = in_dim
    C8 = in_dim // 8

    key = jax.random.PRNGKey(0)
    kx, kq, kbq, kk, kbk, kv, kbv = jax.random.split(key, 7)

    x = jax.random.normal(kx, (B, N, in_dim), dtype=jnp.float32)

    # Deterministic parameter init (Linear weights stored pre-transposed: (in, out)).
    wq = 0.1 * jax.random.normal(kq, (in_dim, C8), dtype=jnp.float32)
    bq = 0.1 * jax.random.normal(kbq, (C8,), dtype=jnp.float32)
    wk = 0.1 * jax.random.normal(kk, (in_dim, C8), dtype=jnp.float32)
    bk = 0.1 * jax.random.normal(kbk, (C8,), dtype=jnp.float32)
    wv = 0.1 * jax.random.normal(kv, (in_dim, in_dim), dtype=jnp.float32)
    bv = 0.1 * jax.random.normal(kbv, (in_dim,), dtype=jnp.float32)

    # Run 1: torch init gamma=0, auto query tile, bf16 attention output.
    # Run 2: nonzero gamma, tq=8 (multi-tile query loop exercising the cached
    #        QKV path across grid steps), f32 attention output.
    configs = ((0.0, None, jnp.bfloat16), (0.5, 8, jnp.float32))
    for gamma_val, tq, attn_dtype in configs:
        gamma = jnp.full((1,), gamma_val, dtype=jnp.float32)

        out, attn = self_attn_forward(x, wq, bq, wk, bk, wv, bv, gamma,
                                      tq=tq, attn_dtype=attn_dtype)
        out = jax.block_until_ready(out)
        attn = jax.block_until_ready(attn)

        ref_out, ref_attn = _reference(x, wq, bq, wk, bk, wv, bv, gamma)
        assert out.shape == (B, N, in_dim) and attn.shape == (B, N, N)
        # bf16 MXU operands / bf16 x / approx reciprocal -> loosened tolerances.
        assert jnp.allclose(attn.astype(jnp.float32), ref_attn,
                            atol=2e-2, rtol=2e-2), "attn mismatch"
        assert jnp.allclose(out, ref_out, atol=5e-2, rtol=5e-2), "out mismatch"

    print("KERNEL_OK")
</pallas_src>

<mosaic_0001>
module attributes {stable_mosaic.version = 11 : i64} {
  func.func @_self_attn_kernel(%arg0: i32, %arg1: i32, %arg2: memref<1x16x32xf32, #tpu.memory_space<vmem>>, %arg3: memref<1x16x32xbf16, #tpu.memory_space<vmem>>, %arg4: memref<32x40xbf16, #tpu.memory_space<vmem>>, %arg5: memref<1x40xf32, #tpu.memory_space<vmem>>, %arg6: memref<1xf32, #tpu.memory_space<smem>>, %arg7: memref<1x16x32xf32, #tpu.memory_space<vmem>>, %arg8: memref<1x16x16xbf16, #tpu.memory_space<vmem>>, %arg9: memref<16x4xbf16, #tpu.memory_space<vmem>>, %arg10: memref<16x4xbf16, #tpu.memory_space<vmem>>, %arg11: memref<16x32xbf16, #tpu.memory_space<vmem>>) attributes {dimension_semantics = [#tpu.dimension_semantics<parallel>, #tpu.dimension_semantics<arbitrary>], iteration_bounds = array<i64: 2, 1>, scalar_prefetch = 0 : i64, scratch_operands = 3 : i64, tpu.core_type = #tpu.core_type<tc>, window_params = [{transform_indices = @transform_0, window_bounds = array<i64: 1, 16, 32>}, {transform_indices = @transform_1, window_bounds = array<i64: 1, 16, 32>}, {pipeline_mode = #tpu.pipeline_mode<synchronous>, transform_indices = @transform_2, window_bounds = array<i64: 32, 40>}, {pipeline_mode = #tpu.pipeline_mode<synchronous>, transform_indices = @transform_3, window_bounds = array<i64: 1, 40>}, {transform_indices = @transform_4, window_bounds = array<i64: 1>}, {transform_indices = @transform_5, window_bounds = array<i64: 1, 16, 32>}, {transform_indices = @transform_6, window_bounds = array<i64: 1, 16, 16>}]} {
    %c0_i32 = arith.constant 0 : i32
    %0 = arith.cmpi eq, %arg1, %c0_i32 : i32
    %1 = arith.extui %0 : i1 to i32
    %c0_i32_0 = arith.constant 0 : i32
    %2 = arith.cmpi ne, %1, %c0_i32_0 : i32
    scf.if %2 {
      %c0_18 = arith.constant 0 : index
      %c0_19 = arith.constant 0 : index
      %c0_20 = arith.constant 0 : index
      %35 = vector.load %arg3[%c0_18, %c0_19, %c0_20] : memref<1x16x32xbf16, #tpu.memory_space<vmem>>, vector<1x16x32xbf16>
      %36 = vector.shape_cast %35 : vector<1x16x32xbf16> to vector<16x32xbf16>
      %c0_21 = arith.constant 0 : index
      %c0_22 = arith.constant 0 : index
      %37 = vector.load %arg4[%c0_21, %c0_22] : memref<32x40xbf16, #tpu.memory_space<vmem>>, vector<32x40xbf16>
      %cst_23 = arith.constant dense<0.000000e+00> : vector<16x40xf32>
      %38 = tpu.matmul %36, %37, %cst_23 {dimension_numbers = #tpu.dot_dimension_numbers<[1], [0], [0], [1], [0, 0, 1, 1], [], []>} : vector<16x32xbf16>, vector<32x40xbf16>, vector<16x40xf32> -> vector<16x40xf32>
      %c0_24 = arith.constant 0 : index
      %c0_25 = arith.constant 0 : index
      %39 = vector.load %arg5[%c0_24, %c0_25] : memref<1x40xf32, #tpu.memory_space<vmem>>, vector<1x40xf32>
      %40 = vector.broadcast %39 : vector<1x40xf32> to vector<16x40xf32>
      %41 = arith.addf %38, %40 : vector<16x40xf32>
      %42 = vector.extract_strided_slice %41 {offsets = [0, 0], sizes = [16, 4], strides = [1, 1]} : vector<16x40xf32> to vector<16x4xf32>
      %43 = arith.truncf %42 : vector<16x4xf32> to vector<16x4xbf16>
      %c0_26 = arith.constant 0 : index
      %c0_27 = arith.constant 0 : index
      %44 = vector.load %arg9[%c0_26, %c0_27] : memref<16x4xbf16, #tpu.memory_space<vmem>>, vector<16x4xbf16>
      tpu.vector_store %arg9[%c0_26, %c0_27], %43 {strides = array<i32>} : memref<16x4xbf16, #tpu.memory_space<vmem>>, vector<16x4xbf16>,
      %45 = vector.extract_strided_slice %41 {offsets = [0, 4], sizes = [16, 4], strides = [1, 1]} : vector<16x40xf32> to vector<16x4xf32>
      %46 = arith.truncf %45 : vector<16x4xf32> to vector<16x4xbf16>
      %c0_28 = arith.constant 0 : index
      %c0_29 = arith.constant 0 : index
      %47 = vector.load %arg10[%c0_28, %c0_29] : memref<16x4xbf16, #tpu.memory_space<vmem>>, vector<16x4xbf16>
      tpu.vector_store %arg10[%c0_28, %c0_29], %46 {strides = array<i32>} : memref<16x4xbf16, #tpu.memory_space<vmem>>, vector<16x4xbf16>,
      %48 = vector.extract_strided_slice %41 {offsets = [0, 8], sizes = [16, 32], strides = [1, 1]} : vector<16x40xf32> to vector<16x32xf32>
      %49 = arith.truncf %48 : vector<16x32xf32> to vector<16x32xbf16>
      %c0_30 = arith.constant 0 : index
      %c0_31 = arith.constant 0 : index
      %50 = vector.load %arg11[%c0_30, %c0_31] : memref<16x32xbf16, #tpu.memory_space<vmem>>, vector<16x32xbf16>
      tpu.vector_store %arg11[%c0_30, %c0_31], %49 {strides = array<i32>} : memref<16x32xbf16, #tpu.memory_space<vmem>>, vector<16x32xbf16>,
    } else {
    }
    %c16_i32 = arith.constant 16 : i32
    %3 = arith.muli %arg1, %c16_i32 : i32
    %4 = tpu.assume_multiple %3, 16 : i32
    %5 = arith.index_cast %4 : i32 to index
    %c0 = arith.constant 0 : index
    %6 = vector.load %arg9[%5, %c0] : memref<16x4xbf16, #tpu.memory_space<vmem>>, vector<16x4xbf16>
    %c0_1 = arith.constant 0 : index
    %c0_2 = arith.constant 0 : index
    %7 = vector.load %arg10[%c0_1, %c0_2] : memref<16x4xbf16, #tpu.memory_space<vmem>>, vector<16x4xbf16>
    %cst = arith.constant dense<0.000000e+00> : vector<16x16xf32>
    %8 = tpu.matmul %6, %7, %cst {dimension_numbers = #tpu.dot_dimension_numbers<[1], [1], [0], [0], [0, 0, 1, 0], [], []>} : vector<16x4xbf16>, vector<16x4xbf16>, vector<16x16xf32> -> vector<16x16xf32>
    %cst_3 = arith.constant dense<0xFF800000> : vector<16xf32>
    %9 = vector.multi_reduction <maximumf>, %8, %cst_3 [1] : vector<16x16xf32> to vector<16xf32>
    %10 = vector.shape_cast %9 : vector<16xf32> to vector<16x1xf32>
    %11 = vector.broadcast %10 : vector<16x1xf32> to vector<16x16xf32>
    %12 = arith.subf %8, %11 : vector<16x16xf32>
    %13 = math.exp %12 : vector<16x16xf32>
    %cst_4 = arith.constant dense<0.000000e+00> : vector<16xf32>
    %14 = vector.multi_reduction <add>, %13, %cst_4 [1] : vector<16x16xf32> to vector<16xf32>
    %15 = vector.shape_cast %14 : vector<16xf32> to vector<16x1xf32>
    %16 = tpu.reciprocal %15 {approx = true} : vector<16x1xf32> -> vector<16x1xf32>
    %17 = vector.broadcast %16 : vector<16x1xf32> to vector<16x16xf32>
    %18 = arith.mulf %13, %17 : vector<16x16xf32>
    %19 = arith.truncf %18 : vector<16x16xf32> to vector<16x16xbf16>
    %c0_5 = arith.constant 0 : index
    %c0_6 = arith.constant 0 : index
    %20 = vector.load %arg11[%c0_5, %c0_6] : memref<16x32xbf16, #tpu.memory_space<vmem>>, vector<16x32xbf16>
    %cst_7 = arith.constant dense<0.000000e+00> : vector<16x32xf32>
    %21 = tpu.matmul %19, %20, %cst_7 {dimension_numbers = #tpu.dot_dimension_numbers<[1], [0], [0], [1], [0, 0, 1, 1], [], []>} : vector<16x16xbf16>, vector<16x32xbf16>, vector<16x32xf32> -> vector<16x32xf32>
    %c0_8 = arith.constant 0 : index
    %22 = memref.load %arg6[%c0_8] : memref<1xf32, #tpu.memory_space<smem>>
    %23 = vector.broadcast %22 : f32 to vector<16x32xf32>
    %24 = arith.mulf %23, %21 : vector<16x32xf32>
    %c0_9 = arith.constant 0 : index
    %c0_10 = arith.constant 0 : index
    %c0_11 = arith.constant 0 : index
    %25 = vector.load %arg2[%c0_9, %c0_10, %c0_11] : memref<1x16x32xf32, #tpu.memory_space<vmem>>, vector<1x16x32xf32>
    %26 = vector.shape_cast %25 : vector<1x16x32xf32> to vector<16x32xf32>
    %27 = arith.addf %24, %26 : vector<16x32xf32>
    %c0_12 = arith.constant 0 : index
    %c0_13 = arith.constant 0 : index
    %c0_14 = arith.constant 0 : index
    %28 = vector.load %arg7[%c0_12, %c0_13, %c0_14] : memref<1x16x32xf32, #tpu.memory_space<vmem>>, vector<1x16x32xf32>
    %29 = vector.shape_cast %28 : vector<1x16x32xf32> to vector<16x32xf32>
    %30 = vector.shape_cast %27 : vector<16x32xf32> to vector<1x16x32xf32>
    tpu.vector_store %arg7[%c0_12, %c0_13, %c0_14], %30 {strides = array<i32>} : memref<1x16x32xf32, #tpu.memory_space<vmem>>, vector<1x16x32xf32>,
    %31 = arith.truncf %18 : vector<16x16xf32> to vector<16x16xbf16>
    %c0_15 = arith.constant 0 : index
    %c0_16 = arith.constant 0 : index
    %c0_17 = arith.constant 0 : index
    %32 = vector.load %arg8[%c0_15, %c0_16, %c0_17] : memref<1x16x16xbf16, #tpu.memory_space<vmem>>, vector<1x16x16xbf16>
    %33 = vector.shape_cast %32 : vector<1x16x16xbf16> to vector<16x16xbf16>
    %34 = vector.shape_cast %31 : vector<16x16xbf16> to vector<1x16x16xbf16>
    tpu.vector_store %arg8[%c0_15, %c0_16, %c0_17], %34 {strides = array<i32>} : memref<1x16x16xbf16, #tpu.memory_space<vmem>>, vector<1x16x16xbf16>,
    return
  }
  func.func @transform_0(%arg0: i32, %arg1: i32) -> (i32, i32, i32) {
    %c0_i32 = arith.constant 0 : i32
    %c0_i32_0 = arith.constant 0 : i32
    return %arg0, %arg1, %c0_i32 : i32, i32, i32
  }
  func.func @transform_1(%arg0: i32, %arg1: i32) -> (i32, i32, i32) {
    %c0_i32 = arith.constant 0 : i32
    %c0_i32_0 = arith.constant 0 : i32
    %c0_i32_1 = arith.constant 0 : i32
    return %arg0, %c0_i32, %c0_i32_0 : i32, i32, i32
  }
  func.func @transform_2(%arg0: i32, %arg1: i32) -> (i32, i32) {
    %c0_i32 = arith.constant 0 : i32
    %c0_i32_0 = arith.constant 0 : i32
    %c0_i32_1 = arith.constant 0 : i32
    return %c0_i32, %c0_i32_0 : i32, i32
  }
  func.func @transform_3(%arg0: i32, %arg1: i32) -> (i32, i32) {
    %c0_i32 = arith.constant 0 : i32
    %c0_i32_0 = arith.constant 0 : i32
    %c0_i32_1 = arith.constant 0 : i32
    return %c0_i32, %c0_i32_0 : i32, i32
  }
  func.func @transform_4(%arg0: i32, %arg1: i32) -> i32 {
    %c0_i32 = arith.constant 0 : i32
    %c0_i32_0 = arith.constant 0 : i32
    return %c0_i32 : i32
  }
  func.func @transform_5(%arg0: i32, %arg1: i32) -> (i32, i32, i32) {
    %c0_i32 = arith.constant 0 : i32
    %c0_i32_0 = arith.constant 0 : i32
    return %arg0, %arg1, %c0_i32 : i32, i32, i32
  }
  func.func @transform_6(%arg0: i32, %arg1: i32) -> (i32, i32, i32) {
    %c0_i32 = arith.constant 0 : i32
    %c0_i32_0 = arith.constant 0 : i32
    return %arg0, %arg1, %c0_i32 : i32, i32, i32
  }
}

</mosaic_0001>

<llo_original>
// kernel: tpu_custom_call.1
$region0: #{tpu_custom_call.1}
  #allocation0 [shape = 'u32[]', space=smem, size = 0x4, offset = 0x4, fixed_abs, tag = 'smem constant byte address 0x4 - core index']
  #allocation1 [shape = 'u32[144,128]{1,0:T(1,128)}', space=vmem, size = 0x12000, scoped, tag = 'internal scratch']
  #allocation2 [shape = 'bf16[16,4]{1,0:T(16,128)(2,1)}', space=vmem, size = 0x1000, scoped, tag = 'scratch operand']
  #allocation3 [shape = 'bf16[16,4]{1,0:T(16,128)(2,1)}', space=vmem, size = 0x1000, scoped, tag = 'scratch operand']
  #allocation4 [shape = 'bf16[16,32]{1,0:T(16,128)(2,1)}', space=vmem, size = 0x1000, scoped, tag = 'scratch operand']
  #allocation5 [shape = 'f32[1]{0:T(128)S(6)}', space=smem, size = 0x200, scoped, tag = 'scoped memory for tpu_custom_call.1']
  %s0 = inlined_call_operand.hbm [shape: f32[2,16,32], index: 0, kind: input, shape index: {}]
  %s1 = inlined_call_operand.hbm [shape: bf16[2,16,32], index: 1, kind: input, shape index: {}]
  %s2 = inlined_call_operand.hbm [shape: bf16[32,40], index: 2, kind: input, shape index: {}]
  %s3 = inlined_call_operand.vmem [shape: f32[1,40], index: 3, kind: input, shape index: {}]
  %s4 = inlined_call_operand.<no memory space> [shape: f32[1], index: 4, kind: input, shape index: {}]
  %s5 = inlined_call_operand.hbm [shape: f32[2,16,32], index: 5, kind: output, shape index: {0}]
  %s6 = inlined_call_operand.hbm [shape: bf16[2,16,16], index: 6, kind: output, shape index: {1}]
  %7 = xla_tuple %s5, %s6
  %s8 = sld [smem:[#allocation0]]
  $region77: #{tpu_custom_call.1} parent=0
    _
  %s10 = ssub.s32 1, %s8
  %s11 = scalar_select 0, %s10, %s8
  %12 = sst [smem:[#allocation5]] %s4
  $region1: #{tpu_custom_call.1} parent=0
    #allocation6 [shape = 'u8[16384]{0}', space=vmem, size = 0x4000, scoped, tag = 'input window, operand 0']
    #allocation7 [shape = 's32[2]{0}', space=sflag, size = 0x8, scoped, tag = 'scoped memory for tpu_custom_call.1']
    #allocation8 [shape = 's32[2]{0}', space=sflag, size = 0x8, scoped, tag = 'scoped memory for tpu_custom_call.1']
    #allocation9 [shape = 'u8[8192]{0}', space=vmem, size = 0x2000, scoped, tag = 'input window, operand 1']
    #allocation10 [shape = 's32[2]{0}', space=sflag, size = 0x8, scoped, tag = 'scoped memory for tpu_custom_call.1']
    #allocation11 [shape = 'u8[8192]{0}', space=vmem, size = 0x2000, scoped, tag = 'input window, operand 2, single buffered']
    #allocation12 [shape = 'u8[16384]{0}', space=vmem, size = 0x4000, scoped, tag = 'output window, operand 0']
    #allocation13 [shape = 'u8[8192]{0}', space=vmem, size = 0x2000, scoped, tag = 'output window, operand 1']
    #allocation14 [shape = 's32[2]{0}', space=sflag, size = 0x8, scoped, tag = 'scoped memory for tpu_custom_call.1']
    %13 = vsyncpa [#allocation7], 0
    %s14 = scalar_lea.sflag [#allocation7], 1
    %15 = vsyncpa %s14, 0
    %16 = vsyncpa [#allocation10], 0
    %s17 = scalar_lea.sflag [#allocation10], 1
    %18 = vsyncpa %s17, 0
    %19 = vsyncpa [#allocation8], 0
    %s20 = scalar_lea.sflag [#allocation8], 1
    %21 = vsyncpa %s20, 0
    %22 = vsyncpa [#allocation14], 0
    %s23 = scalar_lea.sflag [#allocation14], 1
    %24 = vsyncpa %s23, 0
    loop: start=0, step=1, limit=4
    $region2: #{tpu_custom_call.1} parent=1 // loop_pre_header
      _
    $region3: #{tpu_custom_call.1} parent=1 // loop_header
      %s26 = sphi 0, %s30
      %p27 = scmp.ge.s32.totalorder %s26, 4
      %s33 = sphi 0, %s45
      %s34 = sphi 0, %s41
      %s35 = sphi 0, %s33
      %s36 = sphi 0, %s34
      %s37 = sphi 0, %s35
      %s38 = sphi 0, %s36
      %s50 = sphi 0, %s52
      %s53 = sphi 0, %s50
      %s54 = sphi 0, %s53
      %s70 = sphi 0, %s54
      %s76 = sphi 0, %s78
      %s79 = sphi 0, %s76
      %s80 = sphi 0, %s79
      %s96 = sphi 0, %s80
      %s100 = sphi 0, %s100
      %s102 = sphi 0, %s100
      %s103 = sphi 0, %s102
      %s117 = sphi 0, %s103
      %s121 = sphi 0, %s121
      %s123 = sphi 0, %s121
      %s124 = sphi 0, %s123
      %s138 = sphi 0, %s124
      %s142 = sphi 0, %s142
      %s144 = sphi 0, %s142
      %s145 = sphi 0, %s144
      %s159 = sphi 0, %s145
      %s167 = sphi 0, %s169
      %s170 = sphi 0, %s167
      %s171 = sphi 0, %s170
      %s187 = sphi 0, %s171
      %s195 = sphi 0, %s197
      %s198 = sphi 0, %s195
      %s199 = sphi 0, %s198
      %s215 = sphi 0, %s199
    $region4: #{tpu_custom_call.1} parent=1 // loop_header_branch
      %29 = sbr.rel (%p27) target = $region8
    $region5: #{tpu_custom_call.1} parent=1 // loop_body
      %s31 = ssub.s32 %s26, 1
      %s32 = ssub.s32 %s26, 2
      %s39 = sadd.s32 1, %s34
      %p40 = scmp.ge.s32.totalorder %s39, 1
      %s41 = scalar_select %p40, 0, %s39
      %s42 = sadd.s32 1, %s33
      %s43 = scalar_select %p40, %s42, %s33
      %p44 = scmp.ge.s32.totalorder %s43, 2
      %s45 = scalar_select %p44, 0, %s43
      %s46 = ssub.s32 %s33, %s45
      %s47 = ssub.s32 %s34, %s41
      %s48 = sor.u32 %s46, %s47
      %p49 = scmp.eq.s32.totalorder %s48, 0
      %s51 = sadd.s32 %s50, 1
      %s52 = scalar_select %p49, %s50, %s51
      %p55 = pneg %p49
      %p56 = scmp.eq.s32.totalorder %s26, 1
      %p57 = por %p55, %p56
      %p58 = scmp.ne.s32.totalorder %s50, %s53
      %p59 = scmp.eq.s32.totalorder %s26, 0
      %p60 = por %p58, %p59
      %p61 = scmp.ne.s32.totalorder %s50, %s53
      %p62 = scmp.eq.s32.totalorder %s31, 1
      %p63 = por %p61, %p62
      %p64 = scmp.ne.s32.totalorder %s53, %s54
      %p65 = scmp.eq.s32.totalorder %s31, 0
      %p66 = por %p64, %p65
      %p67 = scmp.ne.s32.totalorder %s53, %s54
      %p68 = scmp.eq.s32.totalorder %s32, 1
      %p69 = por %p67, %p68
      %p71 = scmp.ne.s32.totalorder %s54, %s70
      %p72 = scmp.eq.s32.totalorder %s32, 0
      %p73 = por %p71, %p72
      %s74 = ssub.s32 %s33, %s45
      %p75 = scmp.eq.s32.totalorder %s74, 0
      %s77 = sadd.s32 %s76, 1
      %s78 = scalar_select %p75, %s76, %s77
      %p81 = pneg %p75
      %p82 = scmp.eq.s32.totalorder %s26, 1
      %p83 = por %p81, %p82
      %p84 = scmp.ne.s32.totalorder %s76, %s79
      %p85 = scmp.eq.s32.totalorder %s26, 0
      %p86 = por %p84, %p85
      %p87 = scmp.ne.s32.totalorder %s76, %s79
      %p88 = scmp.eq.s32.totalorder %s31, 1
      %p89 = por %p87, %p88
      %p90 = scmp.ne.s32.totalorder %s79, %s80
      %p91 = scmp.eq.s32.totalorder %s31, 0
      %p92 = por %p90, %p91
      %p93 = scmp.ne.s32.totalorder %s79, %s80
      %p94 = scmp.eq.s32.totalorder %s32, 1
      %p95 = por %p93, %p94
      %p97 = scmp.ne.s32.totalorder %s80, %s96
      %p98 = scmp.eq.s32.totalorder %s32, 0
      %p99 = por %p97, %p98
      %s101 = sadd.s32 %s100, 1
      %p104 = scmp.eq.s32.totalorder %s26, 1
      %p105 = scmp.ne.s32.totalorder %s100, %s102
      %p106 = scmp.eq.s32.totalorder %s26, 0
      %p107 = por %p105, %p106
      %p108 = scmp.ne.s32.totalorder %s100, %s102
      %p109 = scmp.eq.s32.totalorder %s31, 1
      %p110 = por %p108, %p109
      %p111 = scmp.ne.s32.totalorder %s102, %s103
      %p112 = scmp.eq.s32.totalorder %s31, 0
      %p113 = por %p111, %p112
      %p114 = scmp.ne.s32.totalorder %s102, %s103
      %p115 = scmp.eq.s32.totalorder %s32, 1
      %p116 = por %p114, %p115
      %p118 = scmp.ne.s32.totalorder %s103, %s117
      %p119 = scmp.eq.s32.totalorder %s32, 0
      %p120 = por %p118, %p119
      %s122 = sadd.s32 %s121, 1
      %p125 = scmp.eq.s32.totalorder %s26, 1
      %p126 = scmp.ne.s32.totalorder %s121, %s123
      %p127 = scmp.eq.s32.totalorder %s26, 0
      %p128 = por %p126, %p127
      %p129 = scmp.ne.s32.totalorder %s121, %s123
      %p130 = scmp.eq.s32.totalorder %s31, 1
      %p131 = por %p129, %p130
      %p132 = scmp.ne.s32.totalorder %s123, %s124
      %p133 = scmp.eq.s32.totalorder %s31, 0
      %p134 = por %p132, %p133
      %p135 = scmp.ne.s32.totalorder %s123, %s124
      %p136 = scmp.eq.s32.totalorder %s32, 1
      %p137 = por %p135, %p136
      %p139 = scmp.ne.s32.totalorder %s124, %s138
      %p140 = scmp.eq.s32.totalorder %s32, 0
      %p141 = por %p139, %p140
      %s143 = sadd.s32 %s142, 1
      %p146 = scmp.eq.s32.totalorder %s26, 1
      %p147 = scmp.ne.s32.totalorder %s142, %s144
      %p148 = scmp.eq.s32.totalorder %s26, 0
      %p149 = por %p147, %p148
      %p150 = scmp.ne.s32.totalorder %s142, %s144
      %p151 = scmp.eq.s32.totalorder %s31, 1
      %p152 = por %p150, %p151
      %p153 = scmp.ne.s32.totalorder %s144, %s145
      %p154 = scmp.eq.s32.totalorder %s31, 0
      %p155 = por %p153, %p154
      %p156 = scmp.ne.s32.totalorder %s144, %s145
      %p157 = scmp.eq.s32.totalorder %s32, 1
      %p158 = por %p156, %p157
      %p160 = scmp.ne.s32.totalorder %s145, %s159
      %p161 = scmp.eq.s32.totalorder %s32, 0
      %p162 = por %p160, %p161
      %s163 = ssub.s32 %s33, %s45
      %s164 = ssub.s32 %s34, %s41
      %s165 = sor.u32 %s163, %s164
      %p166 = scmp.eq.s32.totalorder %s165, 0
      %s168 = sadd.s32 %s167, 1
      %s169 = scalar_select %p166, %s167, %s168
      %p172 = pneg %p166
      %p173 = scmp.eq.s32.totalorder %s26, 1
      %p174 = por %p172, %p173
      %p175 = scmp.ne.s32.totalorder %s167, %s170
      %p176 = scmp.eq.s32.totalorder %s26, 0
      %p177 = por %p175, %p176
      %p178 = scmp.ne.s32.totalorder %s167, %s170
      %p179 = scmp.eq.s32.totalorder %s31, 1
      %p180 = por %p178, %p179
      %p181 = scmp.ne.s32.totalorder %s170, %s171
      %p182 = scmp.eq.s32.totalorder %s31, 0
      %p183 = por %p181, %p182
      %p184 = scmp.ne.s32.totalorder %s170, %s171
      %p185 = scmp.eq.s32.totalorder %s32, 1
      %p186 = por %p184, %p185
      %p188 = scmp.ne.s32.totalorder %s171, %s187
      %p189 = scmp.eq.s32.totalorder %s32, 0
      %p190 = por %p188, %p189
      %s191 = ssub.s32 %s33, %s45
      %s192 = ssub.s32 %s34, %s41
      %s193 = sor.u32 %s191, %s192
      %p194 = scmp.eq.s32.totalorder %s193, 0
      %s196 = sadd.s32 %s195, 1
      %s197 = scalar_select %p194, %s195, %s196
      %p200 = pneg %p194
      %p201 = scmp.eq.s32.totalorder %s26, 1
      %p202 = por %p200, %p201
      %p203 = scmp.ne.s32.totalorder %s195, %s198
      %p204 = scmp.eq.s32.totalorder %s26, 0
      %p205 = por %p203, %p204
      %p206 = scmp.ne.s32.totalorder %s195, %s198
      %p207 = scmp.eq.s32.totalorder %s31, 1
      %p208 = por %p206, %p207
      %p209 = scmp.ne.s32.totalorder %s198, %s199
      %p210 = scmp.eq.s32.totalorder %s31, 0
      %p211 = por %p209, %p210
      %p212 = scmp.ne.s32.totalorder %s198, %s199
      %p213 = scmp.eq.s32.totalorder %s32, 1
      %p214 = por %p212, %p213
      %p216 = scmp.ne.s32.totalorder %s199, %s215
      %p217 = scmp.eq.s32.totalorder %s32, 0
      %p218 = por %p216, %p217
      %p219 = scmp.le.s32.totalorder 1, %s26
      %p220 = scmp.lt.s32.totalorder %s26, 3
      %p221 = pnand %p219, %p220
      %p222 = pneg %p221
      // Predicated region
      $region9: #{tpu_custom_call.1} parent=5 // pred_check
        _
      $region10: #{tpu_custom_call.1} parent=5 // pred_check_branch
        %224 = sbr.rel (%p221) target = $region12
      $region11: #{tpu_custom_call.1} parent=5 // pred_region
        %s225 = ssub.s32 %s26, 1
        // Predicated region
        $region13: #{tpu_custom_call.1} parent=11 // pred_check
          %p226 = pneg %p113
        $region14: #{tpu_custom_call.1} parent=11 // pred_check_branch
          %228 = sbr.rel (%p226) target = $region16
        $region15: #{tpu_custom_call.1} parent=11 // pred_region
          %s230 = ssub.s32 256, 256
          %231 = vsyncadd [#allocation10], %s230
          %s232 = sshll.u32 [#allocation11], 4
          %s233 = int_to_ptr.vmem [resolvable:$true] %s232
          %238 = dma.hbm_to_vmem [thread:$0]  %s2, 256, %s233, [#allocation10], 64, 64, 4
        $region16: #{tpu_custom_call.1} parent=11 // pred_fallthru
          _
        // Predicated region
        $region17: #{tpu_custom_call.1} parent=11 // pred_check
          %p239 = pneg %p134
        $region18: #{tpu_custom_call.1} parent=11 // pred_check_branch
          %241 = sbr.rel (%p239) target = $region20
        $region19: #{tpu_custom_call.1} parent=11 // pred_region
          _
        $region20: #{tpu_custom_call.1} parent=11 // pred_fallthru
          _
        // Predicated region
        $region21: #{tpu_custom_call.1} parent=11 // pred_check
          %p242 = pneg %p155
        $region22: #{tpu_custom_call.1} parent=11 // pred_check_branch
          %244 = sbr.rel (%p242) target = $region24
        $region23: #{tpu_custom_call.1} parent=11 // pred_region
          _
        $region24: #{tpu_custom_call.1} parent=11 // pred_fallthru
          _
      $region12: #{tpu_custom_call.1} parent=5 // pred_fallthru
        _
      %p245 = scmp.lt.s32.totalorder %s26, 2
      // Predicated region
      $region25: #{tpu_custom_call.1} parent=5 // pred_check
        %p246 = pneg %p245
      $region26: #{tpu_custom_call.1} parent=5 // pred_check_branch
        %248 = sbr.rel (%p246) target = $region28
      $region27: #{tpu_custom_call.1} parent=5 // pred_region
        // Predicated region
        $region29: #{tpu_custom_call.1} parent=27 // pred_check
          %p249 = pneg %p60
        $region30: #{tpu_custom_call.1} parent=27 // pred_check_branch
          %251 = sbr.rel (%p249) target = $region32
        $region31: #{tpu_custom_call.1} parent=27 // pred_region
          %s252 = sand.u32 %s50, 1
          %s253 = scalar_lea.sflag [#allocation7], %s252
          %s254 = sand.u32 %s50, 1
          %s255 = smul.addr %s254, 16
          %s256 = scalar_lea.vmem [#allocation6], %s255
          %s257 = smul.u32 2, %s34
          %s259 = ssub.s32 256, 256
          %260 = vsyncadd %s253, %s259
          %s261 = smul.addr %s33, 2
          %s262 = sadd.s32 %s257, %s261
          %s263 = smul.addr %s262, 128
          %s264 = scalar_lea.hbm %s0, %s263
          %s265 = sshll.u32 %s256, 4
          %s266 = int_to_ptr.vmem [resolvable:$true] %s265
          %271 = dma.hbm_to_vmem [thread:$0]  %s264, 256, %s266, %s253, 128, 128, 8
        $region32: #{tpu_custom_call.1} parent=27 // pred_fallthru
          _
        // Predicated region
        $region33: #{tpu_custom_call.1} parent=27 // pred_check
          %p272 = pneg %p86
        $region34: #{tpu_custom_call.1} parent=27 // pred_check_branch
          %274 = sbr.rel (%p272) target = $region36
        $region35: #{tpu_custom_call.1} parent=27 // pred_region
          %s275 = sand.u32 %s26, 1
          %s276 = scalar_lea.sflag [#allocation10], %s275
          %s277 = sand.u32 %s76, 1
          %s278 = smul.addr %s277, 8
          %s279 = scalar_lea.vmem [#allocation9], %s278
          %s281 = ssub.s32 128, 128
          %282 = vsyncadd %s276, %s281
          %s283 = smul.addr %s33, 2
          %s284 = smul.addr %s283, 64
          %s285 = scalar_lea.hbm %s1, %s284
          %s286 = sshll.u32 %s279, 4
          %s287 = int_to_ptr.vmem [resolvable:$true] %s286
          %292 = dma.hbm_to_vmem [thread:$0]  %s285, 128, %s287, %s276, 64, 64, 4
        $region36: #{tpu_custom_call.1} parent=27 // pred_fallthru
          _
      $region28: #{tpu_custom_call.1} parent=5 // pred_fallthru
        _
      %p293 = scmp.le.s32.totalorder 1, %s26
      %p294 = scmp.lt.s32.totalorder %s26, 3
      %p295 = pnand %p293, %p294
      %p296 = pneg %p295
      // Predicated region
      $region37: #{tpu_custom_call.1} parent=5 // pred_check
        _
      $region38: #{tpu_custom_call.1} parent=5 // pred_check_branch
        %298 = sbr.rel (%p295) target = $region40
      $region39: #{tpu_custom_call.1} parent=5 // pred_region
        %s299 = ssub.s32 %s26, 1
        %s300 = sand.u32 %s53, 1
        %s301 = scalar_lea.sflag [#allocation7], %s300
        %s302 = sand.u32 %s53, 1
        %s303 = smul.addr %s302, 16
        %s304 = scalar_lea.vmem [#allocation6], %s303
        // Predicated region
        $region41: #{tpu_custom_call.1} parent=39 // pred_check
          %p305 = pneg %p66
        $region42: #{tpu_custom_call.1} parent=39 // pred_check_branch
          %307 = sbr.rel (%p305) target = $region44
        $region43: #{tpu_custom_call.1} parent=39 // pred_region
          %308 = dma.done %s301, 256
        $region44: #{tpu_custom_call.1} parent=39 // pred_fallthru
          _
        %s309 = sand.u32 %s31, 1
        %s310 = scalar_lea.sflag [#allocation10], %s309
        %s311 = sand.u32 %s79, 1
        %s312 = smul.addr %s311, 8
        %s313 = scalar_lea.vmem [#allocation9], %s312
        // Predicated region
        $region45: #{tpu_custom_call.1} parent=39 // pred_check
          %p314 = pneg %p92
        $region46: #{tpu_custom_call.1} parent=39 // pred_check_branch
          %316 = sbr.rel (%p314) target = $region48
        $region47: #{tpu_custom_call.1} parent=39 // pred_region
          %317 = dma.done %s310, 128
        $region48: #{tpu_custom_call.1} parent=39 // pred_fallthru
          _
        // Predicated region
        $region49: #{tpu_custom_call.1} parent=39 // pred_check
          %p318 = pneg %p113
        $region50: #{tpu_custom_call.1} parent=39 // pred_check_branch
          %320 = sbr.rel (%p318) target = $region52
        $region51: #{tpu_custom_call.1} parent=39 // pred_region
          %321 = dma.done [#allocation10], 256
        $region52: #{tpu_custom_call.1} parent=39 // pred_fallthru
          _
        %s322 = sand.u32 %s53, 1
        %s323 = scalar_lea.sflag [#allocation7], %s322
        %s324 = sand.u32 %s53, 1
        %s325 = smul.addr %s324, 16
        %s326 = scalar_lea.vmem [#allocation6], %s325
        %p327 = pneg %p66
        %p328 = pneg %p63
        %s329 = sand.u32 %s31, 1
        %s330 = scalar_lea.sflag [#allocation10], %s329
        %s331 = sand.u32 %s79, 1
        %s332 = smul.addr %s331, 8
        %s333 = scalar_lea.vmem [#allocation9], %s332
        %p334 = pneg %p92
        %p335 = pneg %p89
        %p336 = pneg %p113
        %p337 = pneg %p110
        %p338 = pneg %p134
        %p339 = pneg %p131
        %p340 = pneg %p155
        %p341 = pneg %p152
        %p342 = pneg %p183
        %p343 = pneg %p180
        %s344 = sand.u32 %s170, 1
        %s345 = scalar_lea.sflag [#allocation8], %s344
        %s346 = sand.u32 %s170, 1
        %s347 = smul.addr %s346, 16
        %s348 = scalar_lea.vmem [#allocation12], %s347
        %p349 = pneg %p211
        %p350 = pneg %p208
        %s351 = sand.u32 %s198, 1
        %s352 = scalar_lea.sflag [#allocation14], %s351
        %s353 = sand.u32 %s198, 1
        %s354 = smul.addr %s353, 8
        %s355 = scalar_lea.vmem [#allocation13], %s354
        %s356 = smul.u32 2, %s36
        %s357 = smul.u32 2, %s36
        %s358 = smul.u32 2, %s36
        %p360 = scmp.eq.s32.totalorder %s36, 0
        // Predicated region
        $region53: #{tpu_custom_call.1} parent=39 // pred_check
          %p361 = pneg %p360
        $region54: #{tpu_custom_call.1} parent=39 // pred_check_branch
          %363 = sbr.rel (%p361) target = $region56
        $region55: #{tpu_custom_call.1} parent=39 // pred_region
          %v364 = vld [vmem:[%s313] sm:$0xf]
          %v365 = vld [vmem:[%s313 + $0x4] sm:$0xf]
          %v366 = vld [vmem:[#allocation11] sm:$0xf]
          %v367 = vld [vmem:[#allocation11 + $0x4] sm:$0xf]
          %v368 = vld [vmem:[#allocation11 + $0x8] sm:$0xf]
          %v369 = vld [vmem:[#allocation11 + $0xc] sm:$0xf]
          %v370 = vld [vmem:[%s3] sm:$0x1]
          %v372 = vlaneseq
          %v373 = vshrl.u32 %v372, 7
          %v374 = vsub.s32 0, %v373
          %v375 = vrot.slane %v370, %v374
          %v379 = vunpack.c.l.b16 %v364
          %v380 = vunpack.c.l.b16 %v365
          %v381 = vpack.c.b16 %v380, %v379
          %v386 = vunpack.c.l.b16 %v366
          %v387 = vunpack.c.l.b16 %v367
          %v388 = vunpack.c.l.b16 %v368
          %v389 = vunpack.c.l.b16 %v369
          %v390 = vpack.c.b16 %v387, %v386
          %v391 = vpack.c.b16 %v389, %v388
          %vm394 = vcmask 261120
          %v396 = vsel %vm394, %v381, 0
          %398 = vmatprep.subr.bf16.mxu0 0
          %399 = vmatpush1.bf16.msra.mxu0 %v390
          %400 = vmatprep.subr.bf16.mxu0 0
          %401 = vmatpush1.bf16.msra.mxu0 %v391
          %402 = vmatprep.subr.bf16.mxu0 0
          %403 = vmatpush1.bf16.msra.mxu0 0
          %404 = vmatprep.subr.bf16.mxu0 0
          %405 = vmatpush1.bf16.msra.mxu0 0
          %406 = vmatprep.subr.bf16.mxu0 0
          %407 = vmatpush1.bf16.msra.mxu0 0
          %408 = vmatprep.subr.bf16.mxu0 0
          %409 = vmatpush1.bf16.msra.mxu0 0
          %410 = vmatprep.subr.bf16.mxu0 0
          %411 = vmatpush1.bf16.msra.mxu0 0
          %412 = vmatprep.subr.bf16.mxu0 0
          %413 = vmatpush1.bf16.msra.mxu0 0
          %414 = vmatprep.subr.bf16.mxu0 0
          %415 = vmatpush1.bf16.msra.mxu0 0
          %416 = vmatprep.subr.bf16.mxu0 0
          %417 = vmatpush1.bf16.msra.mxu0 0
          %418 = vmatprep.subr.bf16.mxu0 0
          %419 = vmatpush1.bf16.msra.mxu0 0
          %420 = vmatprep.subr.bf16.mxu0 0
          %421 = vmatpush1.bf16.msra.mxu0 0
          %422 = vmatprep.subr.bf16.mxu0 0
          %423 = vmatpush1.bf16.msra.mxu0 0
          %424 = vmatprep.subr.bf16.mxu0 0
          %425 = vmatpush1.bf16.msra.mxu0 0
          %426 = vmatprep.subr.bf16.mxu0 0
          %427 = vmatpush1.bf16.msra.mxu0 0
          %428 = vmatprep.subr.bf16.mxu0 0
          %429 = vmatpush1.bf16.msra.mxu0 0
          %430 = vmatprep.mubr.bf16.mxu0 0
          %431 = vmatmul.mubr.bf16.gmra.mrb[0].mxu0 %v396
          %v432 = vpop.f32.mrb[0].mxu0
          %v433 = vadd.f32 %v375, %v432
          %v434 = vpop.f32.mrb[0].mxu0
          %v435 = vpop.f32.mrb[0].mxu0
          %v436 = vadd.f32 %v375, %v435
          %v437 = vpop.f32.mrb[0].mxu0
          %438 = vdwg.mxu0
          %v439 = vpack.c.bf16 %v436, %v433
          %vm440 = vcmask 31744
          %441 = vst.msk [vmem:[#allocation2] sm:$0xff] %vm440, %v439
          %443 = vrot.lane.b32.xlu0 %v439, 124
          %v444 = vpop.permute.xlu0 %443
          %446 = vst.msk [vmem:[#allocation3] sm:$0xff] %vm440, %v444
          %447 = vrot.lane.b32.xlu0 %v439, 120
          %v448 = vpop.permute.xlu0 %447
          %450 = vst.msk [vmem:[#allocation4] sm:$0xff] %vm394, %v448
        $region56: #{tpu_custom_call.1} parent=39 // pred_fallthru
          _
        %s451 = smul.u32 %s36, 16
        %s452 = sshra.s32 %s451, 4
        %s453 = sand.u32 %s451, 15
        %s454 = smul.addr %s452, 8
        %s455 = scalar_lea.vmem [#allocation2], %s454
        %v456 = vld [vmem:[%s455] sm:$0xff]
        %v457 = vld [vmem:[#allocation3] sm:$0xff]
        %vm458 = vcmask 31744
        %v460 = vsel %vm458, %v456, 0
        %v463 = vsel %vm458, %v457, 0
        %465 = vmatprep.subr.bf16.mxu0 0
        %466 = vmatpush1.bf16.xpose.msra.mxu0 %v463
        %467 = vmatprep.subr.bf16.mxu0 0
        %468 = vmatpush1.bf16.xpose.msra.mxu0 0
        %469 = vmatprep.subr.bf16.mxu0 0
        %470 = vmatpush1.bf16.xpose.msra.mxu0 0
        %471 = vmatprep.subr.bf16.mxu0 0
        %472 = vmatpush1.bf16.xpose.msra.mxu0 0
        %473 = vmatprep.subr.bf16.mxu0 0
        %474 = vmatpush1.bf16.xpose.msra.mxu0 0
        %475 = vmatprep.subr.bf16.mxu0 0
        %476 = vmatpush1.bf16.xpose.msra.mxu0 0
        %477 = vmatprep.subr.bf16.mxu0 0
        %478 = vmatpush1.bf16.xpose.msra.mxu0 0
        %479 = vmatprep.subr.bf16.mxu0 0
        %480 = vmatpush1.bf16.xpose.msra.mxu0 0
        %481 = vmatprep.subr.bf16.mxu0 0
        %482 = vmatpush1.bf16.xpose.msra.mxu0 0
        %483 = vmatprep.subr.bf16.mxu0 0
        %484 = vmatpush1.bf16.xpose.msra.mxu0 0
        %485 = vmatprep.subr.bf16.mxu0 0
        %486 = vmatpush1.bf16.xpose.msra.mxu0 0
        %487 = vmatprep.subr.bf16.mxu0 0
        %488 = vmatpush1.bf16.xpose.msra.mxu0 0
        %489 = vmatprep.subr.bf16.mxu0 0
        %490 = vmatpush1.bf16.xpose.msra.mxu0 0
        %491 = vmatprep.subr.bf16.mxu0 0
        %492 = vmatpush1.bf16.xpose.msra.mxu0 0
        %493 = vmatprep.subr.bf16.mxu0 0
        %494 = vmatpush1.bf16.xpose.msra.mxu0 0
        %495 = vmatprep.subr.bf16.mxu0 0
        %496 = vmatpush1.bf16.xpose.msra.mxu0 0
        %497 = vmatprep.mubr.bf16.mxu0 0
        %498 = vmatmul.mubr.bf16.gmra.mrb[0].mxu0 %v460
        %v499 = vpop.f32.mrb[0].mxu0
        %v500 = vadd.f32 0.0, %v499
        %v501 = vpop.f32.mrb[0].mxu0
        %v502 = vpop.f32.mrb[0].mxu0
        %v503 = vadd.f32 0.0, %v502
        %v504 = vpop.f32.mrb[0].mxu0
        %505 = vdwg.mxu0
        %vm506 = vcmask 130048
        %v507 = vsel %vm506, %v500, -inf
        %508 = vmax.xlane.f32.xlu0 %v507
        %v509 = vpop.xlane.xlu0 %508
        %v510 = vsel %vm506, %v503, -inf
        %511 = vmax.xlane.f32.xlu0 %v510
        %v512 = vpop.xlane.xlu0 %511
        %v513 = vsub.f32 %v500, %v509
        %v514 = vsub.f32 %v503, %v512
        %v515 = vmul.f32 %v513, 1.442695
        %v516 = vpow.pop %v515
        %v517 = vmul.f32 %v514, 1.442695
        %v518 = vpow.pop %v517
        %v519 = vsel %vm506, %v516, 0.0
        %520 = vadd.xlane.f32.xlu0 %v519
        %v521 = vpop.xlane.xlu0 %520
        %v522 = vsel %vm506, %v518, 0.0
        %523 = vadd.xlane.f32.xlu0 %v522
        %v524 = vpop.xlane.xlu0 %523
        %v525 = vrcp.pop %v521
        %v526 = vrcp.pop %v524
        %v527 = vmul.f32 %v516, %v525
        %v528 = vmul.f32 %v518, %v526
        %v529 = vpack.c.bf16 %v528, %v527
        %v530 = vld [vmem:[#allocation4] sm:$0xff]
        %v532 = vsel %vm506, %v529, 0
        %534 = vmatprep.subr.bf16.mxu0 0
        %535 = vmatpush1.bf16.msra.mxu0 %v530
        %536 = vmatprep.subr.bf16.mxu0 0
        %537 = vmatpush1.bf16.msra.mxu0 0
        %538 = vmatprep.subr.bf16.mxu0 0
        %539 = vmatpush1.bf16.msra.mxu0 0
        %540 = vmatprep.subr.bf16.mxu0 0
        %541 = vmatpush1.bf16.msra.mxu0 0
        %542 = vmatprep.subr.bf16.mxu0 0
        %543 = vmatpush1.bf16.msra.mxu0 0
        %544 = vmatprep.subr.bf16.mxu0 0
        %545 = vmatpush1.bf16.msra.mxu0 0
        %546 = vmatprep.subr.bf16.mxu0 0
        %547 = vmatpush1.bf16.msra.mxu0 0
        %548 = vmatprep.subr.bf16.mxu0 0
        %549 = vmatpush1.bf16.msra.mxu0 0
        %550 = vmatprep.subr.bf16.mxu0 0
        %551 = vmatpush1.bf16.msra.mxu0 0
        %552 = vmatprep.subr.bf16.mxu0 0
        %553 = vmatpush1.bf16.msra.mxu0 0
        %554 = vmatprep.subr.bf16.mxu0 0
        %555 = vmatpush1.bf16.msra.mxu0 0
        %556 = vmatprep.subr.bf16.mxu0 0
        %557 = vmatpush1.bf16.msra.mxu0 0
        %558 = vmatprep.subr.bf16.mxu0 0
        %559 = vmatpush1.bf16.msra.mxu0 0
        %560 = vmatprep.subr.bf16.mxu0 0
        %561 = vmatpush1.bf16.msra.mxu0 0
        %562 = vmatprep.subr.bf16.mxu0 0
        %563 = vmatpush1.bf16.msra.mxu0 0
        %564 = vmatprep.subr.bf16.mxu0 0
        %565 = vmatpush1.bf16.msra.mxu0 0
        %566 = vmatprep.mubr.bf16.mxu0 0
        %567 = vmatmul.mubr.bf16.gmra.mrb[0].mxu0 %v532
        %v568 = vpop.f32.mrb[0].mxu0
        %v569 = vadd.f32 0.0, %v568
        %v570 = vpop.f32.mrb[0].mxu0
        %v571 = vpop.f32.mrb[0].mxu0
        %v572 = vadd.f32 0.0, %v571
        %v573 = vpop.f32.mrb[0].mxu0
        %574 = vdwg.mxu0
        %s575 = sld [smem:[#allocation5]]
        %v576 = vstv %s575
        %v577 = vmul.f32 %v576, %v569
        %v578 = vmul.f32 %v576, %v572
        %v579 = vld [vmem:[%s304] sm:$0xff]
        %v580 = vld [vmem:[%s304 + $0x8] sm:$0xff]
        %v581 = vadd.f32 %v577, %v579
        %v582 = vadd.f32 %v578, %v580
        %vm583 = vcmask 261120
        %584 = vst.msk [vmem:[%s348] sm:$0xff] %vm583, %v581
        %585 = vst.msk [vmem:[%s348 + $0x8] sm:$0xff] %vm583, %v582
        %v587 = vunpack.c.l.b16 %v529
        %v588 = vunpack.c.h.b16 %v529
        %v589 = vpack.c.b16 %v587, %v587
        %v590 = vpack.c.b16 %v588, %v588
        %vm593 = vcmask 125952
        %594 = vst.msk [vmem:[%s355] sm:$0xf] %vm593, %v589
        %595 = vst.msk [vmem:[%s355 + $0x4] sm:$0xf] %vm593, %v590
        %s596 = sand.u32 %s170, 1
        %s597 = scalar_lea.sflag [#allocation8], %s596
        %s598 = sand.u32 %s170, 1
        %s599 = smul.addr %s598, 16
        %s600 = scalar_lea.vmem [#allocation12], %s599
        %s601 = sand.u32 %s198, 1
        %s602 = scalar_lea.sflag [#allocation14], %s601
        %s603 = sand.u32 %s198, 1
        %s604 = smul.addr %s603, 8
        %s605 = scalar_lea.vmem [#allocation13], %s604
        // Predicated region
        $region57: #{tpu_custom_call.1} parent=39 // pred_check
          %p606 = pneg %p180
        $region58: #{tpu_custom_call.1} parent=39 // pred_check_branch
          %608 = sbr.rel (%p606) target = $region60
        $region59: #{tpu_custom_call.1} parent=39 // pred_region
          %s609 = smul.u32 2, %s36
          %s611 = ssub.s32 256, 256
          %612 = vsyncadd %s597, %s611
          %s613 = smul.addr %s35, 2
          %s614 = sadd.s32 %s609, %s613
          %s615 = smul.addr %s614, 128
          %s616 = scalar_lea.hbm %s5, %s615
          %s617 = sshll.u32 %s600, 4
          %s618 = int_to_ptr.vmem [resolvable:$true] %s617
          %623 = dma.vmem_to_hbm [thread:$0]  %s618, 256, %s616, %s597, 128, 128, 8
        $region60: #{tpu_custom_call.1} parent=39 // pred_fallthru
          _
        // Predicated region
        $region61: #{tpu_custom_call.1} parent=39 // pred_check
          %p624 = pneg %p208
        $region62: #{tpu_custom_call.1} parent=39 // pred_check_branch
          %626 = sbr.rel (%p624) target = $region64
        $region63: #{tpu_custom_call.1} parent=39 // pred_region
          %s627 = smul.u32 2, %s36
          %s629 = ssub.s32 128, 128
          %630 = vsyncadd %s602, %s629
          %s631 = smul.addr %s35, 2
          %s632 = sadd.s32 %s627, %s631
          %s633 = smul.addr %s632, 64
          %s634 = scalar_lea.hbm %s6, %s633
          %s635 = sshll.u32 %s605, 4
          %s636 = int_to_ptr.vmem [resolvable:$true] %s635
          %641 = dma.vmem_to_hbm [thread:$0]  %s636, 128, %s634, %s602, 64, 64, 4
        $region64: #{tpu_custom_call.1} parent=39 // pred_fallthru
          _
      $region40: #{tpu_custom_call.1} parent=5 // pred_fallthru
        _
      %p642 = scmp.le.s32.totalorder 2, %s26
      // Predicated region
      $region65: #{tpu_custom_call.1} parent=5 // pred_check
        %p643 = pneg %p642
      $region66: #{tpu_custom_call.1} parent=5 // pred_check_branch
        %645 = sbr.rel (%p643) target = $region68
      $region67: #{tpu_custom_call.1} parent=5 // pred_region
        %s646 = ssub.s32 %s26, 2
        // Predicated region
        $region69: #{tpu_custom_call.1} parent=67 // pred_check
          %p647 = pneg %p186
        $region70: #{tpu_custom_call.1} parent=67 // pred_check_branch
          %649 = sbr.rel (%p647) target = $region72
        $region71: #{tpu_custom_call.1} parent=67 // pred_region
          %s650 = sand.u32 %s171, 1
          %s651 = scalar_lea.sflag [#allocation8], %s650
          %s652 = sand.u32 %s171, 1
          %s653 = smul.addr %s652, 16
          %s654 = scalar_lea.vmem [#allocation12], %s653
          %655 = dma.done %s651, 256
        $region72: #{tpu_custom_call.1} parent=67 // pred_fallthru
          _
        // Predicated region
        $region73: #{tpu_custom_call.1} parent=67 // pred_check
          %p656 = pneg %p214
        $region74: #{tpu_custom_call.1} parent=67 // pred_check_branch
          %658 = sbr.rel (%p656) target = $region76
        $region75: #{tpu_custom_call.1} parent=67 // pred_region
          %s659 = sand.u32 %s199, 1
          %s660 = scalar_lea.sflag [#allocation14], %s659
          %s661 = sand.u32 %s199, 1
          %s662 = smul.addr %s661, 8
          %s663 = scalar_lea.vmem [#allocation13], %s662
          %664 = dma.done %s660, 128
        $region76: #{tpu_custom_call.1} parent=67 // pred_fallthru
          _
      $region68: #{tpu_custom_call.1} parent=5 // pred_fallthru
        _
    $region6: #{tpu_custom_call.1} parent=1 // loop_footer
      %s30 = sadd.s32 1, %s26
    $region7: #{tpu_custom_call.1} parent=1 // loop_footer_branch
      %25 = sbr.rel target = $region3
    $region8: #{tpu_custom_call.1} parent=1 // loop_exit
      _
    %665 = vsyncpa [#allocation7], 1
    %s666 = scalar_lea.sflag [#allocation7], 1
    %667 = vsyncpa %s666, 1
    %668 = vsyncpa [#allocation10], 1
    %s669 = scalar_lea.sflag [#allocation10], 1
    %670 = vsyncpa %s669, 1
    %671 = vsyncpa [#allocation8], 1
    %s672 = scalar_lea.sflag [#allocation8], 1
    %673 = vsyncpa %s672, 1
    %674 = vsyncpa [#allocation14], 1
    %s675 = scalar_lea.sflag [#allocation14], 1
    %676 = vsyncpa %s675, 1

</llo_original>
